<compile_context>
chip_gen: v7x
topology: tpu7x:2x2x1
jax: 0.10.0
libtpu: 0.0.40
codegen_flags: <defaults>
</compile_context>

<pallas_src>
import math

import jax
import jax.numpy as jnp
import numpy as np
from jax.experimental import pallas as pl
from jax.experimental.pallas import tpu as pltpu

_EPS = 1e-5  # torch LayerNorm default eps


def _make_kernel(n_clusters, weight_coords):
    wc = float(weight_coords)

    def kernel(x_ref, a_ref, e_ref, weff_ref, wext_ref, vecs_ref, s_ref, loss_ref):
        # ---- LayerNorm statistics over the WHOLE X / extra tensors (no affine)
        x = x_ref[...]
        mu = jnp.mean(x, keepdims=True)                       # (1, 1)
        var = jnp.mean((x - mu) ** 2, keepdims=True)          # biased variance
        inv = jax.lax.rsqrt(var + _EPS)

        e = e_ref[...]
        mu_e = jnp.mean(e, keepdims=True)
        var_e = jnp.mean((e - mu_e) ** 2, keepdims=True)
        inv_e = jax.lax.rsqrt(var_e + _EPS)

        vecs = vecs_ref[...]                                  # (3, Cp)
        b_eff = vecs[0:1, :]                                  # folded conv+mlp bias
        csum_w = vecs[1:2, :]                                 # column sums of W_eff
        csum_e = vecs[2:3, :]                                 # column sums of W_ext

        # ---- fused conv + cluster MLP:  Xn @ W == inv*(X @ W) - inv*mu*colsum(W)
        xw = jnp.dot(x, weff_ref[...], preferred_element_type=jnp.float32)   # (N, Cp)
        ew = jnp.dot(e, wext_ref[...], preferred_element_type=jnp.float32)   # (N, Cp)
        logits = (inv * xw - (inv * mu) * csum_w
                  + (wc * inv_e) * ew - (wc * inv_e * mu_e) * csum_e
                  + b_eff)                                    # (N, Cp)
        s_ref[...] = logits                                   # lane-dense unmasked store

        # ---- dense_mincut_pool losses (temp = 1.0, batch of 1)
        # softmax over the REAL clusters only (padded lanes -> -inf -> exp = 0)
        col = jax.lax.broadcasted_iota(jnp.int32, logits.shape, dimension=1)
        masked = jnp.where(col < n_clusters, logits, -jnp.inf)
        m = jnp.max(masked, axis=-1, keepdims=True)
        p = jnp.exp(masked - m)
        s = p * pl.reciprocal(jnp.sum(p, axis=-1, keepdims=True), approx=True)

        a = a_ref[...]
        a_s = jnp.dot(a, s, preferred_element_type=jnp.float32)        # (N, Cp)
        num = jnp.sum(a_s * s, keepdims=True)                          # trace(s^T A s)
        d_flat = jnp.sum(a, axis=1, keepdims=True)                     # degrees, (N, 1)
        den = jnp.sum(d_flat * s * s, keepdims=True)                   # trace(s^T D s)
        loss_mc = -(num * pl.reciprocal(den, approx=True))             # (1, 1)

        ss = jax.lax.dot_general(s, s, (((0,), (0,)), ((), ())),
                                 preferred_element_type=jnp.float32)   # s^T s, (Cp, Cp)
        tr_ss = jnp.sum(s * s, keepdims=True)                          # trace(s^T s)
        nss = jnp.sqrt(jnp.sum(ss * ss, keepdims=True))                # ||s^T s||_F
        # || ss/||ss|| - I/||I|| ||_F == sqrt(2 - 2*tr(ss)/(||ss|| * sqrt(C)))
        ratio = tr_ss * pl.reciprocal(nss * jnp.sqrt(jnp.float32(n_clusters)),
                                      approx=True)
        loss_o = jnp.sqrt(jnp.maximum(2.0 - 2.0 * ratio, 0.0))         # (1, 1)

        loss_ref[:, 0:1] = loss_mc
        loss_ref[:, 1:2] = loss_o

    return kernel


def cluster_ts_forward(X, A, extra_feats, params, *, kernel_size, stride, weight_coords):
    """Pallas version of ClusterTS.forward. Returns (S, loss_mc, loss_o)."""
    conv_w, conv_b, mlp_w, mlp_b = params        # torch shapes: (F,K),(F,),(C,mlp_in),(C,)
    X = X.astype(jnp.float32)
    A = A.astype(jnp.float32)
    extra_feats = extra_feats.astype(jnp.float32)

    n, t = X.shape
    f, k = conv_w.shape
    c = mlp_w.shape[0]
    e = extra_feats.shape[1]
    l_out = math.floor((t - kernel_size) / stride + 1)
    conv_out = f * l_out
    assert mlp_w.shape[1] == conv_out + e
    c_pad = ((c + 127) // 128) * 128             # lane-dense padded cluster axis

    # ---- glue: fold Conv1d weight/bias + per-tap MLP slabs into one (T, C) weight.
    # torch flatten of conv output is f-major: feature index = f * L_out + l.
    wct = conv_w.T.astype(jnp.float32)                               # (K, F)
    bc = conv_b.astype(jnp.float32).reshape(1, f)                    # (1, F)
    w_t = mlp_w.T.astype(jnp.float32)                                # (mlp_in, C)
    wconv = w_t[:conv_out].reshape(f, l_out, c).transpose(1, 0, 2)   # (L_out, F, C)
    wext = w_t[conv_out:]                                            # (E, C)

    w_eff = jnp.zeros((t, c), jnp.float32)
    b_eff = mlp_b.astype(jnp.float32).reshape(1, c)
    for l in range(l_out):                       # static, tiny; runs in the glue only
        m_l = wct @ wconv[l]                     # (K, C)
        w_eff = w_eff.at[l * stride:l * stride + kernel_size, :].add(m_l)
        b_eff = b_eff + bc @ wconv[l]

    # lane-pad the cluster axis; pack bias + column-sums into one small (3, Cp) array
    w_eff_p = jnp.zeros((t, c_pad), jnp.float32).at[:, :c].set(w_eff)
    wext_p = jnp.zeros((e, c_pad), jnp.float32).at[:, :c].set(wext)
    vecs = jnp.zeros((3, c_pad), jnp.float32)
    vecs = vecs.at[0, :c].set(b_eff[0])
    vecs = vecs.at[1, :c].set(jnp.sum(w_eff, axis=0))
    vecs = vecs.at[2, :c].set(jnp.sum(wext, axis=0))

    kernel = _make_kernel(c, weight_coords)
    vmem = pl.BlockSpec(memory_space=pltpu.MemorySpace.VMEM)

    s_pad, losses = pl.pallas_call(
        kernel,
        out_shape=(jax.ShapeDtypeStruct((n, c_pad), jnp.float32),
                   jax.ShapeDtypeStruct((1, 2), jnp.float32)),
        in_specs=[vmem] * 6,
        out_specs=(vmem, vmem),
    )(X, A, extra_feats, w_eff_p, wext_p, vecs)

    return s_pad[:, :c], losses[0, 0], losses[0, 1]


def _reference(X, A, E, conv_w, conv_b, mlp_w, mlp_b, weight_coords, kernel_size, stride):
    """Pure-JAX reference matching the PyTorch forward."""
    X = X.astype(jnp.float32)
    n, t = X.shape
    f, k = conv_w.shape
    l_out = math.floor((t - kernel_size) / stride + 1)
    mu = jnp.mean(X)
    var = jnp.mean((X - mu) ** 2)
    Xn = (X - mu) / jnp.sqrt(var + _EPS)
    cols = jnp.stack([Xn[:, l * stride:l * stride + kernel_size] for l in range(l_out)],
                     axis=1)                                        # (N, L_out, K)
    conv = jnp.einsum('nlk,fk->nfl', cols, conv_w) + conv_b[None, :, None]
    feat = conv.reshape(n, -1)
    mu_e = jnp.mean(E)
    var_e = jnp.mean((E - mu_e) ** 2)
    En = weight_coords * (E - mu_e) / jnp.sqrt(var_e + _EPS)
    feat = jnp.concatenate([feat, En], axis=1)
    S = feat @ mlp_w.T + mlp_b
    s = jax.nn.softmax(S, axis=-1)
    num = jnp.trace(s.T @ A @ s)
    d = jnp.sum(A, axis=1)
    den = jnp.trace(s.T @ (d[:, None] * s))
    mc = -(num / den)
    ss = s.T @ s
    c = S.shape[1]
    i_s = jnp.eye(c)
    o = jnp.linalg.norm(ss / jnp.linalg.norm(ss) - i_s / jnp.linalg.norm(i_s))
    return S, mc, o


if __name__ == "__main__":
    # small config consistent with the module
    N, T = 8, 16                 # nodes, n_timestamps
    F, K, STRIDE = 4, 4, 2       # conv1d_n_feats, kernel_size, stride
    E, C = 4, 4                  # n_extra_feats, n_clusters
    W_COORDS = 0.5
    L_OUT = math.floor((T - K) / STRIDE + 1)
    MLP_IN = F * L_OUT + E

    key = jax.random.PRNGKey(0)
    kx, ka, ke, k1, k2, k3, k4 = jax.random.split(key, 7)

    X = jax.random.normal(kx, (N, T), dtype=jnp.float32)
    A = jnp.abs(jax.random.normal(ka, (N, N), dtype=jnp.float32))
    A = 0.5 * (A + A.T)                                   # symmetric non-negative adjacency
    extra = jax.random.normal(ke, (N, E), dtype=jnp.float32)

    # deterministic synthetic parameters (torch Conv1d weight (F,1,K) squeezed to (F,K))
    conv_w = jax.random.normal(k1, (F, K), dtype=jnp.float32) * 0.2
    conv_b = jax.random.normal(k2, (F,), dtype=jnp.float32) * 0.1
    mlp_w = jax.random.normal(k3, (C, MLP_IN), dtype=jnp.float32) * 0.1
    mlp_b = jax.random.normal(k4, (C,), dtype=jnp.float32) * 0.1
    params = (conv_w, conv_b, mlp_w, mlp_b)

    S, loss_mc, loss_o = cluster_ts_forward(
        X, A, extra, params, kernel_size=K, stride=STRIDE, weight_coords=W_COORDS)
    jax.block_until_ready((S, loss_mc, loss_o))

    S_ref, mc_ref, o_ref = _reference(X, A, extra, conv_w, conv_b, mlp_w, mlp_b,
                                      W_COORDS, K, STRIDE)
    np.testing.assert_allclose(np.asarray(S), np.asarray(S_ref), rtol=2e-3, atol=2e-3)
    np.testing.assert_allclose(float(loss_mc), float(mc_ref), rtol=2e-3, atol=2e-3)
    np.testing.assert_allclose(float(loss_o), float(o_ref), rtol=2e-3, atol=2e-3)

    print("KERNEL_OK")
</pallas_src>

<mosaic_0001>
module attributes {stable_mosaic.version = 11 : i64} {
  func.func @kernel(%arg0: memref<8x16xf32, #tpu.memory_space<vmem>>, %arg1: memref<8x8xf32, #tpu.memory_space<vmem>>, %arg2: memref<8x4xf32, #tpu.memory_space<vmem>>, %arg3: memref<16x128xf32, #tpu.memory_space<vmem>>, %arg4: memref<4x128xf32, #tpu.memory_space<vmem>>, %arg5: memref<3x128xf32, #tpu.memory_space<vmem>>, %arg6: memref<8x128xf32, #tpu.memory_space<vmem>>, %arg7: memref<1x2xf32, #tpu.memory_space<vmem>>) attributes {dimension_semantics = [], scalar_prefetch = 0 : i64, scratch_operands = 0 : i64, tpu.core_type = #tpu.core_type<tc>} {
    %c0 = arith.constant 0 : index
    %c0_0 = arith.constant 0 : index
    %0 = vector.load %arg0[%c0, %c0_0] : memref<8x16xf32, #tpu.memory_space<vmem>>, vector<8x16xf32>
    %1 = vector.shape_cast %0 : vector<8x16xf32> to vector<1x8x16xf32>
    %cst = arith.constant dense<0.000000e+00> : vector<1xf32>
    %2 = vector.multi_reduction <add>, %1, %cst [1, 2] : vector<1x8x16xf32> to vector<1xf32>
    %3 = vector.shape_cast %2 : vector<1xf32> to vector<1x1x1xf32>
    %4 = vector.extract %3[0, 0, 0] : f32 from vector<1x1x1xf32>
    %5 = vector.broadcast %4 : f32 to vector<1x1xf32>
    %cst_1 = arith.constant 1.280000e+02 : f32
    %6 = vector.broadcast %cst_1 : f32 to vector<1x1xf32>
    %7 = arith.divf %5, %6 : vector<1x1xf32>
    %8 = vector.broadcast %7 : vector<1x1xf32> to vector<8x16xf32>
    %9 = arith.subf %0, %8 : vector<8x16xf32>
    %10 = arith.mulf %9, %9 : vector<8x16xf32>
    %11 = vector.shape_cast %10 : vector<8x16xf32> to vector<1x8x16xf32>
    %cst_2 = arith.constant dense<0.000000e+00> : vector<1xf32>
    %12 = vector.multi_reduction <add>, %11, %cst_2 [1, 2] : vector<1x8x16xf32> to vector<1xf32>
    %13 = vector.shape_cast %12 : vector<1xf32> to vector<1x1x1xf32>
    %14 = vector.extract %13[0, 0, 0] : f32 from vector<1x1x1xf32>
    %15 = vector.broadcast %14 : f32 to vector<1x1xf32>
    %cst_3 = arith.constant 1.280000e+02 : f32
    %16 = vector.broadcast %cst_3 : f32 to vector<1x1xf32>
    %17 = arith.divf %15, %16 : vector<1x1xf32>
    %cst_4 = arith.constant 9.99999974E-6 : f32
    %18 = vector.broadcast %cst_4 : f32 to vector<1x1xf32>
    %19 = arith.addf %17, %18 : vector<1x1xf32>
    %20 = math.rsqrt %19 : vector<1x1xf32>
    %c0_5 = arith.constant 0 : index
    %c0_6 = arith.constant 0 : index
    %21 = vector.load %arg2[%c0_5, %c0_6] : memref<8x4xf32, #tpu.memory_space<vmem>>, vector<8x4xf32>
    %22 = vector.shape_cast %21 : vector<8x4xf32> to vector<1x8x4xf32>
    %cst_7 = arith.constant dense<0.000000e+00> : vector<1xf32>
    %23 = vector.multi_reduction <add>, %22, %cst_7 [1, 2] : vector<1x8x4xf32> to vector<1xf32>
    %24 = vector.shape_cast %23 : vector<1xf32> to vector<1x1x1xf32>
    %25 = vector.extract %24[0, 0, 0] : f32 from vector<1x1x1xf32>
    %26 = vector.broadcast %25 : f32 to vector<1x1xf32>
    %cst_8 = arith.constant 3.200000e+01 : f32
    %27 = vector.broadcast %cst_8 : f32 to vector<1x1xf32>
    %28 = arith.divf %26, %27 : vector<1x1xf32>
    %29 = vector.broadcast %28 : vector<1x1xf32> to vector<8x4xf32>
    %30 = arith.subf %21, %29 : vector<8x4xf32>
    %31 = arith.mulf %30, %30 : vector<8x4xf32>
    %32 = vector.shape_cast %31 : vector<8x4xf32> to vector<1x8x4xf32>
    %cst_9 = arith.constant dense<0.000000e+00> : vector<1xf32>
    %33 = vector.multi_reduction <add>, %32, %cst_9 [1, 2] : vector<1x8x4xf32> to vector<1xf32>
    %34 = vector.shape_cast %33 : vector<1xf32> to vector<1x1x1xf32>
    %35 = vector.extract %34[0, 0, 0] : f32 from vector<1x1x1xf32>
    %36 = vector.broadcast %35 : f32 to vector<1x1xf32>
    %cst_10 = arith.constant 3.200000e+01 : f32
    %37 = vector.broadcast %cst_10 : f32 to vector<1x1xf32>
    %38 = arith.divf %36, %37 : vector<1x1xf32>
    %cst_11 = arith.constant 9.99999974E-6 : f32
    %39 = vector.broadcast %cst_11 : f32 to vector<1x1xf32>
    %40 = arith.addf %38, %39 : vector<1x1xf32>
    %41 = math.rsqrt %40 : vector<1x1xf32>
    %c0_12 = arith.constant 0 : index
    %c0_13 = arith.constant 0 : index
    %42 = vector.load %arg5[%c0_12, %c0_13] : memref<3x128xf32, #tpu.memory_space<vmem>>, vector<3x128xf32>
    %43 = vector.extract_strided_slice %42 {offsets = [0, 0], sizes = [1, 128], strides = [1, 1]} : vector<3x128xf32> to vector<1x128xf32>
    %44 = vector.extract_strided_slice %42 {offsets = [1, 0], sizes = [1, 128], strides = [1, 1]} : vector<3x128xf32> to vector<1x128xf32>
    %45 = vector.extract_strided_slice %42 {offsets = [2, 0], sizes = [1, 128], strides = [1, 1]} : vector<3x128xf32> to vector<1x128xf32>
    %c0_14 = arith.constant 0 : index
    %c0_15 = arith.constant 0 : index
    %46 = vector.load %arg3[%c0_14, %c0_15] : memref<16x128xf32, #tpu.memory_space<vmem>>, vector<16x128xf32>
    %cst_16 = arith.constant dense<0.000000e+00> : vector<8x128xf32>
    %47 = tpu.matmul %0, %46, %cst_16 {dimension_numbers = #tpu.dot_dimension_numbers<[1], [0], [0], [1], [0, 0, 1, 1], [], []>} : vector<8x16xf32>, vector<16x128xf32>, vector<8x128xf32> -> vector<8x128xf32>
    %c0_17 = arith.constant 0 : index
    %c0_18 = arith.constant 0 : index
    %48 = vector.load %arg4[%c0_17, %c0_18] : memref<4x128xf32, #tpu.memory_space<vmem>>, vector<4x128xf32>
    %cst_19 = arith.constant dense<0.000000e+00> : vector<8x128xf32>
    %49 = tpu.matmul %21, %48, %cst_19 {dimension_numbers = #tpu.dot_dimension_numbers<[1], [0], [0], [1], [0, 0, 1, 1], [], []>} : vector<8x4xf32>, vector<4x128xf32>, vector<8x128xf32> -> vector<8x128xf32>
    %50 = vector.broadcast %20 : vector<1x1xf32> to vector<8x128xf32>
    %51 = arith.mulf %50, %47 : vector<8x128xf32>
    %52 = arith.mulf %20, %7 : vector<1x1xf32>
    %53 = vector.broadcast %52 : vector<1x1xf32> to vector<1x128xf32>
    %54 = arith.mulf %53, %44 : vector<1x128xf32>
    %55 = vector.broadcast %54 : vector<1x128xf32> to vector<8x128xf32>
    %56 = arith.subf %51, %55 : vector<8x128xf32>
    %cst_20 = arith.constant 5.000000e-01 : f32
    %57 = vector.broadcast %cst_20 : f32 to vector<1x1xf32>
    %58 = arith.mulf %57, %41 : vector<1x1xf32>
    %59 = vector.broadcast %58 : vector<1x1xf32> to vector<8x128xf32>
    %60 = arith.mulf %59, %49 : vector<8x128xf32>
    %61 = arith.addf %56, %60 : vector<8x128xf32>
    %cst_21 = arith.constant 5.000000e-01 : f32
    %62 = vector.broadcast %cst_21 : f32 to vector<1x1xf32>
    %63 = arith.mulf %62, %41 : vector<1x1xf32>
    %64 = arith.mulf %63, %28 : vector<1x1xf32>
    %65 = vector.broadcast %64 : vector<1x1xf32> to vector<1x128xf32>
    %66 = arith.mulf %65, %45 : vector<1x128xf32>
    %67 = vector.broadcast %66 : vector<1x128xf32> to vector<8x128xf32>
    %68 = arith.subf %61, %67 : vector<8x128xf32>
    %69 = vector.broadcast %43 : vector<1x128xf32> to vector<8x128xf32>
    %70 = arith.addf %68, %69 : vector<8x128xf32>
    %c0_22 = arith.constant 0 : index
    %c0_23 = arith.constant 0 : index
    %71 = vector.load %arg6[%c0_22, %c0_23] : memref<8x128xf32, #tpu.memory_space<vmem>>, vector<8x128xf32>
    tpu.vector_store %arg6[%c0_22, %c0_23], %70 {strides = array<i32>} : memref<8x128xf32, #tpu.memory_space<vmem>>, vector<8x128xf32>,
    %72 = tpu.iota {dimensions = array<i32: 1>} : vector<8x128xi32>
    %c4_i32 = arith.constant 4 : i32
    %73 = vector.broadcast %c4_i32 : i32 to vector<8x128xi32>
    %74 = arith.cmpi slt, %72, %73 : vector<8x128xi32>
    %cst_24 = arith.constant 0xFF800000 : f32
    %75 = vector.broadcast %cst_24 : f32 to vector<8x128xf32>
    %76 = arith.select %74, %70, %75 : vector<8x128xi1>, vector<8x128xf32>
    %cst_25 = arith.constant dense<0xFF800000> : vector<8xf32>
    %77 = vector.multi_reduction <maximumf>, %76, %cst_25 [1] : vector<8x128xf32> to vector<8xf32>
    %78 = vector.shape_cast %77 : vector<8xf32> to vector<8x1xf32>
    %79 = vector.broadcast %78 : vector<8x1xf32> to vector<8x128xf32>
    %80 = arith.subf %76, %79 : vector<8x128xf32>
    %81 = math.exp %80 : vector<8x128xf32>
    %cst_26 = arith.constant dense<0.000000e+00> : vector<8xf32>
    %82 = vector.multi_reduction <add>, %81, %cst_26 [1] : vector<8x128xf32> to vector<8xf32>
    %83 = vector.shape_cast %82 : vector<8xf32> to vector<8x1xf32>
    %84 = tpu.reciprocal %83 {approx = true} : vector<8x1xf32> -> vector<8x1xf32>
    %85 = vector.broadcast %84 : vector<8x1xf32> to vector<8x128xf32>
    %86 = arith.mulf %81, %85 : vector<8x128xf32>
    %c0_27 = arith.constant 0 : index
    %c0_28 = arith.constant 0 : index
    %87 = vector.load %arg1[%c0_27, %c0_28] : memref<8x8xf32, #tpu.memory_space<vmem>>, vector<8x8xf32>
    %cst_29 = arith.constant dense<0.000000e+00> : vector<8x128xf32>
    %88 = tpu.matmul %87, %86, %cst_29 {dimension_numbers = #tpu.dot_dimension_numbers<[1], [0], [0], [1], [0, 0, 1, 1], [], []>} : vector<8x8xf32>, vector<8x128xf32>, vector<8x128xf32> -> vector<8x128xf32>
    %89 = arith.mulf %88, %86 : vector<8x128xf32>
    %90 = vector.shape_cast %89 : vector<8x128xf32> to vector<1x8x128xf32>
    %cst_30 = arith.constant dense<0.000000e+00> : vector<1xf32>
    %91 = vector.multi_reduction <add>, %90, %cst_30 [1, 2] : vector<1x8x128xf32> to vector<1xf32>
    %92 = vector.shape_cast %91 : vector<1xf32> to vector<1x1x1xf32>
    %93 = vector.extract %92[0, 0, 0] : f32 from vector<1x1x1xf32>
    %94 = vector.broadcast %93 : f32 to vector<1x1xf32>
    %cst_31 = arith.constant dense<0.000000e+00> : vector<8xf32>
    %95 = vector.multi_reduction <add>, %87, %cst_31 [1] : vector<8x8xf32> to vector<8xf32>
    %96 = vector.shape_cast %95 : vector<8xf32> to vector<8x1xf32>
    %97 = vector.broadcast %96 : vector<8x1xf32> to vector<8x128xf32>
    %98 = arith.mulf %97, %86 : vector<8x128xf32>
    %99 = arith.mulf %98, %86 : vector<8x128xf32>
    %100 = vector.shape_cast %99 : vector<8x128xf32> to vector<1x8x128xf32>
    %cst_32 = arith.constant dense<0.000000e+00> : vector<1xf32>
    %101 = vector.multi_reduction <add>, %100, %cst_32 [1, 2] : vector<1x8x128xf32> to vector<1xf32>
    %102 = vector.shape_cast %101 : vector<1xf32> to vector<1x1x1xf32>
    %103 = vector.extract %102[0, 0, 0] : f32 from vector<1x1x1xf32>
    %104 = vector.broadcast %103 : f32 to vector<1x1xf32>
    %105 = tpu.reciprocal %104 {approx = true} : vector<1x1xf32> -> vector<1x1xf32>
    %106 = arith.mulf %94, %105 : vector<1x1xf32>
    %cst_33 = arith.constant 0.000000e+00 : f32
    %107 = vector.broadcast %cst_33 : f32 to vector<1x1xf32>
    %108 = arith.subf %107, %106 : vector<1x1xf32>
    %cst_34 = arith.constant dense<0.000000e+00> : vector<128x128xf32>
    %109 = tpu.matmul %86, %86, %cst_34 {dimension_numbers = #tpu.dot_dimension_numbers<[0], [0], [1], [1], [0, 1, 1, 1], [], []>} : vector<8x128xf32>, vector<8x128xf32>, vector<128x128xf32> -> vector<128x128xf32>
    %110 = arith.mulf %86, %86 : vector<8x128xf32>
    %111 = vector.shape_cast %110 : vector<8x128xf32> to vector<1x8x128xf32>
    %cst_35 = arith.constant dense<0.000000e+00> : vector<1xf32>
    %112 = vector.multi_reduction <add>, %111, %cst_35 [1, 2] : vector<1x8x128xf32> to vector<1xf32>
    %113 = vector.shape_cast %112 : vector<1xf32> to vector<1x1x1xf32>
    %114 = vector.extract %113[0, 0, 0] : f32 from vector<1x1x1xf32>
    %115 = vector.broadcast %114 : f32 to vector<1x1xf32>
    %116 = arith.mulf %109, %109 : vector<128x128xf32>
    %117 = vector.shape_cast %116 : vector<128x128xf32> to vector<1x128x128xf32>
    %cst_36 = arith.constant dense<0.000000e+00> : vector<1xf32>
    %118 = vector.multi_reduction <add>, %117, %cst_36 [1, 2] : vector<1x128x128xf32> to vector<1xf32>
    %119 = vector.shape_cast %118 : vector<1xf32> to vector<1x1x1xf32>
    %120 = vector.extract %119[0, 0, 0] : f32 from vector<1x1x1xf32>
    %121 = vector.broadcast %120 : f32 to vector<1x1xf32>
    %122 = math.sqrt %121 : vector<1x1xf32>
    %cst_37 = arith.constant 4.000000e+00 : f32
    %123 = math.sqrt %cst_37 : f32
    %124 = vector.broadcast %123 : f32 to vector<1x1xf32>
    %125 = arith.mulf %122, %124 : vector<1x1xf32>
    %126 = tpu.reciprocal %125 {approx = true} : vector<1x1xf32> -> vector<1x1xf32>
    %127 = arith.mulf %115, %126 : vector<1x1xf32>
    %cst_38 = arith.constant 2.000000e+00 : f32
    %128 = vector.broadcast %cst_38 : f32 to vector<1x1xf32>
    %129 = arith.mulf %128, %127 : vector<1x1xf32>
    %cst_39 = arith.constant 2.000000e+00 : f32
    %130 = vector.broadcast %cst_39 : f32 to vector<1x1xf32>
    %131 = arith.subf %130, %129 : vector<1x1xf32>
    %cst_40 = arith.constant 0.000000e+00 : f32
    %132 = vector.broadcast %cst_40 : f32 to vector<1x1xf32>
    %133 = arith.maximumf %131, %132 : vector<1x1xf32>
    %134 = math.sqrt %133 : vector<1x1xf32>
    %c0_41 = arith.constant 0 : index
    %c0_42 = arith.constant 0 : index
    %135 = vector.load %arg7[%c0_41, %c0_42] : memref<1x2xf32, #tpu.memory_space<vmem>>, vector<1x1xf32>
    tpu.vector_store %arg7[%c0_41, %c0_42], %108 {strides = array<i32>} : memref<1x2xf32, #tpu.memory_space<vmem>>, vector<1x1xf32>,
    %c0_43 = arith.constant 0 : index
    %c1 = arith.constant 1 : index
    %136 = vector.load %arg7[%c0_43, %c1] : memref<1x2xf32, #tpu.memory_space<vmem>>, vector<1x1xf32>
    tpu.vector_store %arg7[%c0_43, %c1], %134 {strides = array<i32>} : memref<1x2xf32, #tpu.memory_space<vmem>>, vector<1x1xf32>,
    return
  }
}

</mosaic_0001>

<llo_original>
// kernel: tpu_custom_call.1
$region0: #{tpu_custom_call.1}
  #allocation0 [shape = 'u32[]', space=smem, size = 0x4, offset = 0x4, fixed_abs, tag = 'smem constant byte address 0x4 - core index']
  #allocation1 [shape = 'u32[144,128]{1,0:T(1,128)}', space=vmem, size = 0x12000, scoped, tag = 'internal scratch']
  %s0 = inlined_call_operand.hbm [shape: f32[8,16], index: 0, kind: input, shape index: {}]
  %s1 = inlined_call_operand.hbm [shape: f32[8,8], index: 1, kind: input, shape index: {}]
  %s2 = inlined_call_operand.vmem [shape: f32[8,4], index: 2, kind: input, shape index: {}]
  %s3 = inlined_call_operand.vmem [shape: f32[16,128], index: 3, kind: input, shape index: {}]
  %s4 = inlined_call_operand.vmem [shape: f32[4,128], index: 4, kind: input, shape index: {}]
  %s5 = inlined_call_operand.vmem [shape: f32[3,128], index: 5, kind: input, shape index: {}]
  %s6 = inlined_call_operand.hbm [shape: f32[8,128], index: 6, kind: output, shape index: {0}]
  %s7 = inlined_call_operand.hbm [shape: f32[1,2], index: 7, kind: output, shape index: {1}]
  %8 = xla_tuple %s6, %s7
  %s9 = sld [smem:[#allocation0]]
  $region50: #{tpu_custom_call.1} parent=0
    _
  %s11 = ssub.s32 1, %s9
  %s12 = scalar_select 0, %s11, %s9
  $region1: #{tpu_custom_call.1} parent=0
    #allocation2 [shape = 'u8[4096]{0}', space=vmem, size = 0x1000, scoped, tag = 'input window, operand 0, single buffered']
    #allocation3 [shape = 's32[1]{0}', space=sflag, size = 0x4, scoped, tag = 'scoped memory for tpu_custom_call.1']
    #allocation4 [shape = 's32[1]{0}', space=sflag, size = 0x4, scoped, tag = 'scoped memory for tpu_custom_call.1']
    #allocation5 [shape = 'u8[4096]{0}', space=vmem, size = 0x1000, scoped, tag = 'input window, operand 1, single buffered']
    #allocation6 [shape = 's32[1]{0}', space=sflag, size = 0x4, scoped, tag = 'scoped memory for tpu_custom_call.1']
    #allocation7 [shape = 'u8[4096]{0}', space=vmem, size = 0x1000, scoped, tag = 'output window, operand 0, single buffered']
    #allocation8 [shape = 'u8[512]{0}', space=vmem, size = 0x400, scoped, tag = 'output window, operand 1, single buffered']
    #allocation9 [shape = 's32[1]{0}', space=sflag, size = 0x4, scoped, tag = 'scoped memory for tpu_custom_call.1']
    %13 = vsyncpa [#allocation3], 0
    %14 = vsyncpa [#allocation6], 0
    %15 = vsyncpa [#allocation4], 0
    %16 = vsyncpa [#allocation9], 0
    // Predicated region
    $region2: #{tpu_custom_call.1} parent=1 // pred_check
      _
    $region3: #{tpu_custom_call.1} parent=1 // pred_check_branch
      %18 = sbr.rel (0) target = $region5
    $region4: #{tpu_custom_call.1} parent=1 // pred_region
      %s20 = ssub.s32 128, 128
      %21 = vsyncadd [#allocation3], %s20
      %s23 = sshll.u32 [#allocation2], 4
      %s24 = int_to_ptr.vmem [resolvable:$true] %s23
      %26 = dma.hbm_to_vmem [thread:$0]  %s0, 128, %s24, [#allocation3]
    $region5: #{tpu_custom_call.1} parent=1 // pred_fallthru
      _
    // Predicated region
    $region6: #{tpu_custom_call.1} parent=1 // pred_check
      _
    $region7: #{tpu_custom_call.1} parent=1 // pred_check_branch
      %28 = sbr.rel (0) target = $region9
    $region8: #{tpu_custom_call.1} parent=1 // pred_region
      %s30 = ssub.s32 128, 128
      %31 = vsyncadd [#allocation6], %s30
      %s33 = sshll.u32 [#allocation5], 4
      %s34 = int_to_ptr.vmem [resolvable:$true] %s33
      %36 = dma.hbm_to_vmem [thread:$0]  %s1, 128, %s34, [#allocation6]
    $region9: #{tpu_custom_call.1} parent=1 // pred_fallthru
      _
    // Predicated region
    $region10: #{tpu_custom_call.1} parent=1 // pred_check
      _
    $region11: #{tpu_custom_call.1} parent=1 // pred_check_branch
      %38 = sbr.rel (0) target = $region13
    $region12: #{tpu_custom_call.1} parent=1 // pred_region
      _
    $region13: #{tpu_custom_call.1} parent=1 // pred_fallthru
      _
    // Predicated region
    $region14: #{tpu_custom_call.1} parent=1 // pred_check
      _
    $region15: #{tpu_custom_call.1} parent=1 // pred_check_branch
      %40 = sbr.rel (0) target = $region17
    $region16: #{tpu_custom_call.1} parent=1 // pred_region
      _
    $region17: #{tpu_custom_call.1} parent=1 // pred_fallthru
      _
    // Predicated region
    $region18: #{tpu_custom_call.1} parent=1 // pred_check
      _
    $region19: #{tpu_custom_call.1} parent=1 // pred_check_branch
      %42 = sbr.rel (0) target = $region21
    $region20: #{tpu_custom_call.1} parent=1 // pred_region
      _
    $region21: #{tpu_custom_call.1} parent=1 // pred_fallthru
      _
    // Predicated region
    $region22: #{tpu_custom_call.1} parent=1 // pred_check
      _
    $region23: #{tpu_custom_call.1} parent=1 // pred_check_branch
      %44 = sbr.rel (0) target = $region25
    $region24: #{tpu_custom_call.1} parent=1 // pred_region
      _
    $region25: #{tpu_custom_call.1} parent=1 // pred_fallthru
      _
    // Predicated region
    $region26: #{tpu_custom_call.1} parent=1 // pred_check
      _
    $region27: #{tpu_custom_call.1} parent=1 // pred_check_branch
      %46 = sbr.rel (0) target = $region29
    $region28: #{tpu_custom_call.1} parent=1 // pred_region
      %47 = dma.done [#allocation3], 128
    $region29: #{tpu_custom_call.1} parent=1 // pred_fallthru
      _
    // Predicated region
    $region30: #{tpu_custom_call.1} parent=1 // pred_check
      _
    $region31: #{tpu_custom_call.1} parent=1 // pred_check_branch
      %49 = sbr.rel (0) target = $region33
    $region32: #{tpu_custom_call.1} parent=1 // pred_region
      %50 = dma.done [#allocation6], 128
    $region33: #{tpu_custom_call.1} parent=1 // pred_fallthru
      _
    %v51 = vld [vmem:[#allocation2] sm:$0xff]
    %vm52 = vcmask 130048
    %v53 = vsel %vm52, %v51, 0.0
    %54 = vadd.xlane.f32.xlu0 %v53
    %v55 = vpop.xlane.xlu0 %54
    %v56 = vrot.slane %v55, 4
    %v57 = vadd.f32 %v55, %v56
    %v58 = vrot.slane %v57, 2
    %v59 = vadd.f32 %v57, %v58
    %v60 = vrot.slane %v59, 1
    %v61 = vadd.f32 %v59, %v60
    %s62 = vtos %v61
    %v63 = vstv %s62
    %v64 = vrcp.pop 128.0
    %v65 = vmul.f32 %v63, %v64
    %v66 = vsub.f32 %v51, %v65
    %v67 = vmul.f32 %v66, %v66
    %v68 = vsel %vm52, %v67, 0.0
    %69 = vadd.xlane.f32.xlu0 %v68
    %v70 = vpop.xlane.xlu0 %69
    %v71 = vrot.slane %v70, 4
    %v72 = vadd.f32 %v70, %v71
    %v73 = vrot.slane %v72, 2
    %v74 = vadd.f32 %v72, %v73
    %v75 = vrot.slane %v74, 1
    %v76 = vadd.f32 %v74, %v75
    %s77 = vtos %v76
    %v78 = vstv %s77
    %v79 = vmul.f32 %v78, %v64
    %v80 = vadd.f32 %v79, 1e-05
    %v81 = vrsqrt.pop %v80
    %v82 = vld [vmem:[%s2] sm:$0xff]
    %vm83 = vcmask 31744
    %v84 = vsel %vm83, %v82, 0.0
    %85 = vadd.xlane.f32.xlu0 %v84
    %v86 = vpop.xlane.xlu0 %85
    %v87 = vrot.slane %v86, 4
    %v88 = vadd.f32 %v86, %v87
    %v89 = vrot.slane %v88, 2
    %v90 = vadd.f32 %v88, %v89
    %v91 = vrot.slane %v90, 1
    %v92 = vadd.f32 %v90, %v91
    %s93 = vtos %v92
    %v94 = vstv %s93
    %v95 = vrcp.pop 32.0
    %v96 = vmul.f32 %v94, %v95
    %v97 = vsub.f32 %v82, %v96
    %v98 = vmul.f32 %v97, %v97
    %v99 = vsel %vm83, %v98, 0.0
    %100 = vadd.xlane.f32.xlu0 %v99
    %v101 = vpop.xlane.xlu0 %100
    %v102 = vrot.slane %v101, 4
    %v103 = vadd.f32 %v101, %v102
    %v104 = vrot.slane %v103, 2
    %v105 = vadd.f32 %v103, %v104
    %v106 = vrot.slane %v105, 1
    %v107 = vadd.f32 %v105, %v106
    %s108 = vtos %v107
    %v109 = vstv %s108
    %v110 = vmul.f32 %v109, %v95
    %v111 = vadd.f32 %v110, 1e-05
    %v112 = vrsqrt.pop %v111
    %v113 = vld [vmem:[%s5] sm:$0x7]
    %v114 = vld [vmem:[%s3] sm:$0xff]
    %v115 = vld [vmem:[%s3 + $0x8] sm:$0xff]
    %v117 = vsel %vm52, %v51, 0
    %119 = vmatprep.subr.mxu0 0.0
    %120 = vmatpush1.msra.mxu0 %v114
    %121 = vmatprep.subr.mxu0 0.0
    %122 = vmatpush1.msra.mxu0 %v115
    %123 = vmatprep.subr.mxu0 0.0
    %124 = vmatpush1.msra.mxu0 0.0
    %125 = vmatprep.subr.mxu0 0.0
    %126 = vmatpush1.msra.mxu0 0.0
    %127 = vmatprep.subr.mxu0 0.0
    %128 = vmatpush1.msra.mxu0 0.0
    %129 = vmatprep.subr.mxu0 0.0
    %130 = vmatpush1.msra.mxu0 0.0
    %131 = vmatprep.subr.mxu0 0.0
    %132 = vmatpush1.msra.mxu0 0.0
    %133 = vmatprep.subr.mxu0 0.0
    %134 = vmatpush1.msra.mxu0 0.0
    %135 = vmatprep.subr.mxu0 0.0
    %136 = vmatpush1.msra.mxu0 0.0
    %137 = vmatprep.subr.mxu0 0.0
    %138 = vmatpush1.msra.mxu0 0.0
    %139 = vmatprep.subr.mxu0 0.0
    %140 = vmatpush1.msra.mxu0 0.0
    %141 = vmatprep.subr.mxu0 0.0
    %142 = vmatpush1.msra.mxu0 0.0
    %143 = vmatprep.subr.mxu0 0.0
    %144 = vmatpush1.msra.mxu0 0.0
    %145 = vmatprep.subr.mxu0 0.0
    %146 = vmatpush1.msra.mxu0 0.0
    %147 = vmatprep.subr.mxu0 0.0
    %148 = vmatpush1.msra.mxu0 0.0
    %149 = vmatprep.subr.mxu0 0.0
    %150 = vmatpush1.msra.mxu0 0.0
    %151 = vmatprep.subr.mxu0 0.0
    %152 = vmatpush1.msra.mxu0 0.0
    %153 = vmatprep.subr.mxu0 0.0
    %154 = vmatpush1.msra.mxu0 0.0
    %155 = vmatprep.subr.mxu0 0.0
    %156 = vmatpush1.msra.mxu0 0.0
    %157 = vmatprep.subr.mxu0 0.0
    %158 = vmatpush1.msra.mxu0 0.0
    %159 = vmatprep.subr.mxu0 0.0
    %160 = vmatpush1.msra.mxu0 0.0
    %161 = vmatprep.subr.mxu0 0.0
    %162 = vmatpush1.msra.mxu0 0.0
    %163 = vmatprep.subr.mxu0 0.0
    %164 = vmatpush1.msra.mxu0 0.0
    %165 = vmatprep.subr.mxu0 0.0
    %166 = vmatpush1.msra.mxu0 0.0
    %167 = vmatprep.subr.mxu0 0.0
    %168 = vmatpush1.msra.mxu0 0.0
    %169 = vmatprep.subr.mxu0 0.0
    %170 = vmatpush1.msra.mxu0 0.0
    %171 = vmatprep.subr.mxu0 0.0
    %172 = vmatpush1.msra.mxu0 0.0
    %173 = vmatprep.subr.mxu0 0.0
    %174 = vmatpush1.msra.mxu0 0.0
    %175 = vmatprep.subr.mxu0 0.0
    %176 = vmatpush1.msra.mxu0 0.0
    %177 = vmatprep.subr.mxu0 0.0
    %178 = vmatpush1.msra.mxu0 0.0
    %179 = vmatprep.subr.mxu0 0.0
    %180 = vmatpush1.msra.mxu0 0.0
    %181 = vmatprep.subr.mxu0 0.0
    %182 = vmatpush1.msra.mxu0 0.0
    %183 = vmatprep.mubr.f32.mxu0 0.0
    %184 = vmatmul.mubr.f32.gmra.mrb[0].mxu0 %v117
    %v185 = vpop.f32.mrb[0].mxu0
    %v186 = vadd.f32 0.0, %v185
    %v187 = vpop.f32.mrb[0].mxu0
    %188 = vdwg.mxu0
    %v189 = vld [vmem:[%s4] sm:$0xf]
    %v191 = vsel %vm83, %v82, 0
    %vm193 = vcmask 1043456
    %v195 = vsel %vm193, %v189, 0
    %197 = vmatprep.subr.mxu0 0.0
    %198 = vmatpush1.msra.mxu0 %v195
    %199 = vmatprep.subr.mxu0 0.0
    %200 = vmatpush1.msra.mxu0 0.0
    %201 = vmatprep.subr.mxu0 0.0
    %202 = vmatpush1.msra.mxu0 0.0
    %203 = vmatprep.subr.mxu0 0.0
    %204 = vmatpush1.msra.mxu0 0.0
    %205 = vmatprep.subr.mxu0 0.0
    %206 = vmatpush1.msra.mxu0 0.0
    %207 = vmatprep.subr.mxu0 0.0
    %208 = vmatpush1.msra.mxu0 0.0
    %209 = vmatprep.subr.mxu0 0.0
    %210 = vmatpush1.msra.mxu0 0.0
    %211 = vmatprep.subr.mxu0 0.0
    %212 = vmatpush1.msra.mxu0 0.0
    %213 = vmatprep.subr.mxu0 0.0
    %214 = vmatpush1.msra.mxu0 0.0
    %215 = vmatprep.subr.mxu0 0.0
    %216 = vmatpush1.msra.mxu0 0.0
    %217 = vmatprep.subr.mxu0 0.0
    %218 = vmatpush1.msra.mxu0 0.0
    %219 = vmatprep.subr.mxu0 0.0
    %220 = vmatpush1.msra.mxu0 0.0
    %221 = vmatprep.subr.mxu0 0.0
    %222 = vmatpush1.msra.mxu0 0.0
    %223 = vmatprep.subr.mxu0 0.0
    %224 = vmatpush1.msra.mxu0 0.0
    %225 = vmatprep.subr.mxu0 0.0
    %226 = vmatpush1.msra.mxu0 0.0
    %227 = vmatprep.subr.mxu0 0.0
    %228 = vmatpush1.msra.mxu0 0.0
    %229 = vmatprep.subr.mxu0 0.0
    %230 = vmatpush1.msra.mxu0 0.0
    %231 = vmatprep.subr.mxu0 0.0
    %232 = vmatpush1.msra.mxu0 0.0
    %233 = vmatprep.subr.mxu0 0.0
    %234 = vmatpush1.msra.mxu0 0.0
    %235 = vmatprep.subr.mxu0 0.0
    %236 = vmatpush1.msra.mxu0 0.0
    %237 = vmatprep.subr.mxu0 0.0
    %238 = vmatpush1.msra.mxu0 0.0
    %239 = vmatprep.subr.mxu0 0.0
    %240 = vmatpush1.msra.mxu0 0.0
    %241 = vmatprep.subr.mxu0 0.0
    %242 = vmatpush1.msra.mxu0 0.0
    %243 = vmatprep.subr.mxu0 0.0
    %244 = vmatpush1.msra.mxu0 0.0
    %245 = vmatprep.subr.mxu0 0.0
    %246 = vmatpush1.msra.mxu0 0.0
    %247 = vmatprep.subr.mxu0 0.0
    %248 = vmatpush1.msra.mxu0 0.0
    %249 = vmatprep.subr.mxu0 0.0
    %250 = vmatpush1.msra.mxu0 0.0
    %251 = vmatprep.subr.mxu0 0.0
    %252 = vmatpush1.msra.mxu0 0.0
    %253 = vmatprep.subr.mxu0 0.0
    %254 = vmatpush1.msra.mxu0 0.0
    %255 = vmatprep.subr.mxu0 0.0
    %256 = vmatpush1.msra.mxu0 0.0
    %257 = vmatprep.subr.mxu0 0.0
    %258 = vmatpush1.msra.mxu0 0.0
    %259 = vmatprep.subr.mxu0 0.0
    %260 = vmatpush1.msra.mxu0 0.0
    %261 = vmatprep.mubr.f32.mxu0 0.0
    %262 = vmatmul.mubr.f32.gmra.mrb[0].mxu0 %v191
    %v263 = vpop.f32.mrb[0].mxu0
    %v264 = vadd.f32 0.0, %v263
    %v265 = vpop.f32.mrb[0].mxu0
    %266 = vdwg.mxu0
    %v267 = vmul.f32 %v81, %v186
    %v268 = vmul.f32 %v81, %v65
    %v269 = vmul.f32 %v268, %v113
    %v270 = vlaneseq
    %v271 = vshrl.u32 %v270, 7
    %v272 = vsub.s32 1, %v271
    %v273 = vrot.slane %v269, %v272
    %v274 = vsub.f32 %v267, %v273
    %v275 = vmul.f32 %v112, 0.5
    %v276 = vmul.f32 %v275, %v264
    %v277 = vadd.f32 %v274, %v276
    %v278 = vmul.f32 %v275, %v96
    %v279 = vmul.f32 %v278, %v113
    %v280 = vlaneseq
    %v281 = vshrl.u32 %v280, 7
    %v282 = vsub.s32 2, %v281
    %v283 = vrot.slane %v279, %v282
    %v284 = vsub.f32 %v277, %v283
    %v285 = vlaneseq
    %v286 = vshrl.u32 %v285, 7
    %v287 = vsub.s32 0, %v286
    %v288 = vrot.slane %v113, %v287
    %v289 = vadd.f32 %v284, %v288
    %290 = vst [vmem:[#allocation7] sm:$0xff] %v289
    %v291 = vlaneseq
    %v292 = vand.u32 %v291, 127
    %vm293 = vcmp.lt.s32.totalorder %v292, 4
    %v294 = vsel %vm293, %v289, -inf
    %295 = vmax.xlane.f32.xlu0 %v294
    %v296 = vpop.xlane.xlu0 %295
    %v297 = vsub.f32 %v294, %v296
    %v298 = vmul.f32 %v297, 1.442695
    %v299 = vpow.pop %v298
    %300 = vadd.xlane.f32.xlu0 %v299
    %v301 = vpop.xlane.xlu0 %300
    %v302 = vrcp.pop %v301
    %v303 = vmul.f32 %v299, %v302
    %v304 = vld [vmem:[#allocation5] sm:$0xff]
    %vm305 = vcmask 64512
    %v307 = vsel %vm305, %v304, 0
    %309 = vmatprep.subr.mxu0 0.0
    %310 = vmatpush1.msra.mxu0 %v303
    %311 = vmatprep.subr.mxu0 0.0
    %312 = vmatpush1.msra.mxu0 0.0
    %313 = vmatprep.subr.mxu0 0.0
    %314 = vmatpush1.msra.mxu0 0.0
    %315 = vmatprep.subr.mxu0 0.0
    %316 = vmatpush1.msra.mxu0 0.0
    %317 = vmatprep.subr.mxu0 0.0
    %318 = vmatpush1.msra.mxu0 0.0
    %319 = vmatprep.subr.mxu0 0.0
    %320 = vmatpush1.msra.mxu0 0.0
    %321 = vmatprep.subr.mxu0 0.0
    %322 = vmatpush1.msra.mxu0 0.0
    %323 = vmatprep.subr.mxu0 0.0
    %324 = vmatpush1.msra.mxu0 0.0
    %325 = vmatprep.subr.mxu0 0.0
    %326 = vmatpush1.msra.mxu0 0.0
    %327 = vmatprep.subr.mxu0 0.0
    %328 = vmatpush1.msra.mxu0 0.0
    %329 = vmatprep.subr.mxu0 0.0
    %330 = vmatpush1.msra.mxu0 0.0
    %331 = vmatprep.subr.mxu0 0.0
    %332 = vmatpush1.msra.mxu0 0.0
    %333 = vmatprep.subr.mxu0 0.0
    %334 = vmatpush1.msra.mxu0 0.0
    %335 = vmatprep.subr.mxu0 0.0
    %336 = vmatpush1.msra.mxu0 0.0
    %337 = vmatprep.subr.mxu0 0.0
    %338 = vmatpush1.msra.mxu0 0.0
    %339 = vmatprep.subr.mxu0 0.0
    %340 = vmatpush1.msra.mxu0 0.0
    %341 = vmatprep.subr.mxu0 0.0
    %342 = vmatpush1.msra.mxu0 0.0
    %343 = vmatprep.subr.mxu0 0.0
    %344 = vmatpush1.msra.mxu0 0.0
    %345 = vmatprep.subr.mxu0 0.0
    %346 = vmatpush1.msra.mxu0 0.0
    %347 = vmatprep.subr.mxu0 0.0
    %348 = vmatpush1.msra.mxu0 0.0
    %349 = vmatprep.subr.mxu0 0.0
    %350 = vmatpush1.msra.mxu0 0.0
    %351 = vmatprep.subr.mxu0 0.0
    %352 = vmatpush1.msra.mxu0 0.0
    %353 = vmatprep.subr.mxu0 0.0
    %354 = vmatpush1.msra.mxu0 0.0
    %355 = vmatprep.subr.mxu0 0.0
    %356 = vmatpush1.msra.mxu0 0.0
    %357 = vmatprep.subr.mxu0 0.0
    %358 = vmatpush1.msra.mxu0 0.0
    %359 = vmatprep.subr.mxu0 0.0
    %360 = vmatpush1.msra.mxu0 0.0
    %361 = vmatprep.subr.mxu0 0.0
    %362 = vmatpush1.msra.mxu0 0.0
    %363 = vmatprep.subr.mxu0 0.0
    %364 = vmatpush1.msra.mxu0 0.0
    %365 = vmatprep.subr.mxu0 0.0
    %366 = vmatpush1.msra.mxu0 0.0
    %367 = vmatprep.subr.mxu0 0.0
    %368 = vmatpush1.msra.mxu0 0.0
    %369 = vmatprep.subr.mxu0 0.0
    %370 = vmatpush1.msra.mxu0 0.0
    %371 = vmatprep.subr.mxu0 0.0
    %372 = vmatpush1.msra.mxu0 0.0
    %373 = vmatprep.mubr.f32.mxu0 0.0
    %374 = vmatmul.mubr.f32.gmra.mrb[0].mxu0 %v307
    %v375 = vpop.f32.mrb[0].mxu0
    %v376 = vadd.f32 0.0, %v375
    %v377 = vpop.f32.mrb[0].mxu0
    %378 = vdwg.mxu0
    %v379 = vmul.f32 %v376, %v303
    %380 = vadd.xlane.f32.xlu0 %v379
    %v381 = vpop.xlane.xlu0 %380
    %v382 = vrot.slane %v381, 4
    %v383 = vadd.f32 %v381, %v382
    %v384 = vrot.slane %v383, 2
    %v385 = vadd.f32 %v383, %v384
    %v386 = vrot.slane %v385, 1
    %v387 = vadd.f32 %v385, %v386
    %s388 = vtos %v387
    %v389 = vstv %s388
    %v390 = vsel %vm305, %v304, 0.0
    %391 = vadd.xlane.f32.xlu0 %v390
    %v392 = vpop.xlane.xlu0 %391
    %v393 = vmul.f32 %v392, %v303
    %v394 = vmul.f32 %v393, %v303
    %395 = vadd.xlane.f32.xlu0 %v394
    %v396 = vpop.xlane.xlu0 %395
    %v397 = vrot.slane %v396, 4
    %v398 = vadd.f32 %v396, %v397
    %v399 = vrot.slane %v398, 2
    %v400 = vadd.f32 %v398, %v399
    %v401 = vrot.slane %v400, 1
    %v402 = vadd.f32 %v400, %v401
    %s403 = vtos %v402
    %v404 = vstv %s403
    %v405 = vrcp.pop %v404
    %v406 = vmul.f32 %v389, %v405
    %v407 = vsub.f32 0.0, %v406
    %408 = vxpose.xlu0.b32.start [1/16] %v303, 128
    %409 = vxpose.xlu0.b32.cont [2/16] 0.0, 128
    %410 = vxpose.xlu0.b32.cont [3/16] 0.0, 128
    %411 = vxpose.xlu0.b32.cont [4/16] 0.0, 128
    %412 = vxpose.xlu0.b32.cont [5/16] 0.0, 128
    %413 = vxpose.xlu0.b32.cont [6/16] 0.0, 128
    %414 = vxpose.xlu0.b32.cont [7/16] 0.0, 128
    %415 = vxpose.xlu0.b32.cont [8/16] 0.0, 128
    %416 = vxpose.xlu0.b32.cont [9/16] 0.0, 128
    %417 = vxpose.xlu0.b32.cont [10/16] 0.0, 128
    %418 = vxpose.xlu0.b32.cont [11/16] 0.0, 128
    %419 = vxpose.xlu0.b32.cont [12/16] 0.0, 128
    %420 = vxpose.xlu0.b32.cont [13/16] 0.0, 128
    %421 = vxpose.xlu0.b32.cont [14/16] 0.0, 128
    %422 = vxpose.xlu0.b32.cont [15/16] 0.0, 128
    %423 = vxpose.xlu0.b32.end [16/16] 0.0, 128
    %v424 = vpop.trf.xlu0
    %v425 = vpop.trf.xlu0
    %v426 = vpop.trf.xlu0
    %v427 = vpop.trf.xlu0
    %v428 = vpop.trf.xlu0
    %v429 = vpop.trf.xlu0
    %v430 = vpop.trf.xlu0
    %v431 = vpop.trf.xlu0
    %v432 = vpop.trf.xlu0
    %v433 = vpop.trf.xlu0
    %v434 = vpop.trf.xlu0
    %v435 = vpop.trf.xlu0
    %v436 = vpop.trf.xlu0
    %v437 = vpop.trf.xlu0
    %v438 = vpop.trf.xlu0
    %v439 = vpop.trf.xlu0
    %v441 = vsel %vm305, %v424, 0
    %v444 = vsel %vm305, %v425, 0
    %v447 = vsel %vm305, %v426, 0
    %v450 = vsel %vm305, %v427, 0
    %v453 = vsel %vm305, %v428, 0
    %v456 = vsel %vm305, %v429, 0
    %v459 = vsel %vm305, %v430, 0
    %v462 = vsel %vm305, %v431, 0
    %v465 = vsel %vm305, %v432, 0
    %v468 = vsel %vm305, %v433, 0
    %v471 = vsel %vm305, %v434, 0
    %v474 = vsel %vm305, %v435, 0
    %v477 = vsel %vm305, %v436, 0
    %v480 = vsel %vm305, %v437, 0
    %v483 = vsel %vm305, %v438, 0
    %v486 = vsel %vm305, %v439, 0
    %488 = vmatprep.subr.mxu0 0.0
    %489 = vmatpush1.msra.mxu0 %v303
    %490 = vmatprep.subr.mxu0 0.0
    %491 = vmatpush1.msra.mxu0 0.0
    %492 = vmatprep.subr.mxu0 0.0
    %493 = vmatpush1.msra.mxu0 0.0
    %494 = vmatprep.subr.mxu0 0.0
    %495 = vmatpush1.msra.mxu0 0.0
    %496 = vmatprep.subr.mxu0 0.0
    %497 = vmatpush1.msra.mxu0 0.0
    %498 = vmatprep.subr.mxu0 0.0
    %499 = vmatpush1.msra.mxu0 0.0
    %500 = vmatprep.subr.mxu0 0.0
    %501 = vmatpush1.msra.mxu0 0.0
    %502 = vmatprep.subr.mxu0 0.0
    %503 = vmatpush1.msra.mxu0 0.0
    %504 = vmatprep.subr.mxu0 0.0
    %505 = vmatpush1.msra.mxu0 0.0
    %506 = vmatprep.subr.mxu0 0.0
    %507 = vmatpush1.msra.mxu0 0.0
    %508 = vmatprep.subr.mxu0 0.0
    %509 = vmatpush1.msra.mxu0 0.0
    %510 = vmatprep.subr.mxu0 0.0
    %511 = vmatpush1.msra.mxu0 0.0
    %512 = vmatprep.subr.mxu0 0.0
    %513 = vmatpush1.msra.mxu0 0.0
    %514 = vmatprep.subr.mxu0 0.0
    %515 = vmatpush1.msra.mxu0 0.0
    %516 = vmatprep.subr.mxu0 0.0
    %517 = vmatpush1.msra.mxu0 0.0
    %518 = vmatprep.subr.mxu0 0.0
    %519 = vmatpush1.msra.mxu0 0.0
    %520 = vmatprep.subr.mxu0 0.0
    %521 = vmatpush1.msra.mxu0 0.0
    %522 = vmatprep.subr.mxu0 0.0
    %523 = vmatpush1.msra.mxu0 0.0
    %524 = vmatprep.subr.mxu0 0.0
    %525 = vmatpush1.msra.mxu0 0.0
    %526 = vmatprep.subr.mxu0 0.0
    %527 = vmatpush1.msra.mxu0 0.0
    %528 = vmatprep.subr.mxu0 0.0
    %529 = vmatpush1.msra.mxu0 0.0
    %530 = vmatprep.subr.mxu0 0.0
    %531 = vmatpush1.msra.mxu0 0.0
    %532 = vmatprep.subr.mxu0 0.0
    %533 = vmatpush1.msra.mxu0 0.0
    %534 = vmatprep.subr.mxu0 0.0
    %535 = vmatpush1.msra.mxu0 0.0
    %536 = vmatprep.subr.mxu0 0.0
    %537 = vmatpush1.msra.mxu0 0.0
    %538 = vmatprep.subr.mxu0 0.0
    %539 = vmatpush1.msra.mxu0 0.0
    %540 = vmatprep.subr.mxu0 0.0
    %541 = vmatpush1.msra.mxu0 0.0
    %542 = vmatprep.subr.mxu0 0.0
    %543 = vmatpush1.msra.mxu0 0.0
    %544 = vmatprep.subr.mxu0 0.0
    %545 = vmatpush1.msra.mxu0 0.0
    %546 = vmatprep.subr.mxu0 0.0
    %547 = vmatpush1.msra.mxu0 0.0
    %548 = vmatprep.subr.mxu0 0.0
    %549 = vmatpush1.msra.mxu0 0.0
    %550 = vmatprep.subr.mxu0 0.0
    %551 = vmatpush1.msra.mxu0 0.0
    %552 = vmatprep.mubr.f32.mxu0 0.0
    %553 = vmatmul.mubr.f32.gmra.mrb[0].mxu0 %v441
    %v554 = vpop.f32.mrb[0].mxu0
    %v555 = vadd.f32 0.0, %v554
    %v556 = vpop.f32.mrb[0].mxu0
    %557 = vmatprep.mubr.f32.mxu0 0.0
    %558 = vmatmul.mubr.f32.gmra.mrb[0].mxu0 %v444
    %v559 = vpop.f32.mrb[0].mxu0
    %v560 = vadd.f32 0.0, %v559
    %v561 = vpop.f32.mrb[0].mxu0
    %562 = vmatprep.mubr.f32.mxu0 0.0
    %563 = vmatmul.mubr.f32.gmra.mrb[0].mxu0 %v447
    %v564 = vpop.f32.mrb[0].mxu0
    %v565 = vadd.f32 0.0, %v564
    %v566 = vpop.f32.mrb[0].mxu0
    %567 = vmatprep.mubr.f32.mxu0 0.0
    %568 = vmatmul.mubr.f32.gmra.mrb[0].mxu0 %v450
    %v569 = vpop.f32.mrb[0].mxu0
    %v570 = vadd.f32 0.0, %v569
    %v571 = vpop.f32.mrb[0].mxu0
    %572 = vmatprep.mubr.f32.mxu0 0.0
    %573 = vmatmul.mubr.f32.gmra.mrb[0].mxu0 %v453
    %v574 = vpop.f32.mrb[0].mxu0
    %v575 = vadd.f32 0.0, %v574
    %v576 = vpop.f32.mrb[0].mxu0
    %577 = vmatprep.mubr.f32.mxu0 0.0
    %578 = vmatmul.mubr.f32.gmra.mrb[0].mxu0 %v456
    %v579 = vpop.f32.mrb[0].mxu0
    %v580 = vadd.f32 0.0, %v579
    %v581 = vpop.f32.mrb[0].mxu0
    %582 = vmatprep.mubr.f32.mxu0 0.0
    %583 = vmatmul.mubr.f32.gmra.mrb[0].mxu0 %v459
    %v584 = vpop.f32.mrb[0].mxu0
    %v585 = vadd.f32 0.0, %v584
    %v586 = vpop.f32.mrb[0].mxu0
    %587 = vmatprep.mubr.f32.mxu0 0.0
    %588 = vmatmul.mubr.f32.gmra.mrb[0].mxu0 %v462
    %v589 = vpop.f32.mrb[0].mxu0
    %v590 = vadd.f32 0.0, %v589
    %v591 = vpop.f32.mrb[0].mxu0
    %592 = vmatprep.mubr.f32.mxu0 0.0
    %593 = vmatmul.mubr.f32.gmra.mrb[0].mxu0 %v465
    %v594 = vpop.f32.mrb[0].mxu0
    %v595 = vadd.f32 0.0, %v594
    %v596 = vpop.f32.mrb[0].mxu0
    %597 = vmatprep.mubr.f32.mxu0 0.0
    %598 = vmatmul.mubr.f32.gmra.mrb[0].mxu0 %v468
    %v599 = vpop.f32.mrb[0].mxu0
    %v600 = vadd.f32 0.0, %v599
    %v601 = vpop.f32.mrb[0].mxu0
    %602 = vmatprep.mubr.f32.mxu0 0.0
    %603 = vmatmul.mubr.f32.gmra.mrb[0].mxu0 %v471
    %v604 = vpop.f32.mrb[0].mxu0
    %v605 = vadd.f32 0.0, %v604
    %v606 = vpop.f32.mrb[0].mxu0
    %607 = vmatprep.mubr.f32.mxu0 0.0
    %608 = vmatmul.mubr.f32.gmra.mrb[0].mxu0 %v474
    %v609 = vpop.f32.mrb[0].mxu0
    %v610 = vadd.f32 0.0, %v609
    %v611 = vpop.f32.mrb[0].mxu0
    %612 = vmatprep.mubr.f32.mxu0 0.0
    %613 = vmatmul.mubr.f32.gmra.mrb[0].mxu0 %v477
    %v614 = vpop.f32.mrb[0].mxu0
    %v615 = vadd.f32 0.0, %v614
    %v616 = vpop.f32.mrb[0].mxu0
    %617 = vmatprep.mubr.f32.mxu0 0.0
    %618 = vmatmul.mubr.f32.gmra.mrb[0].mxu0 %v480
    %v619 = vpop.f32.mrb[0].mxu0
    %v620 = vadd.f32 0.0, %v619
    %v621 = vpop.f32.mrb[0].mxu0
    %622 = vmatprep.mubr.f32.mxu0 0.0
    %623 = vmatmul.mubr.f32.gmra.mrb[0].mxu0 %v483
    %v624 = vpop.f32.mrb[0].mxu0
    %v625 = vadd.f32 0.0, %v624
    %v626 = vpop.f32.mrb[0].mxu0
    %627 = vmatprep.mubr.f32.mxu0 0.0
    %628 = vmatmul.mubr.f32.gmra.mrb[0].mxu0 %v486
    %v629 = vpop.f32.mrb[0].mxu0
    %v630 = vadd.f32 0.0, %v629
    %v631 = vpop.f32.mrb[0].mxu0
    %632 = vdwg.mxu0
    %v633 = vmul.f32 %v303, %v303
    %634 = vadd.xlane.f32.xlu0 %v633
    %v635 = vpop.xlane.xlu0 %634
    %v636 = vrot.slane %v635, 4
    %v637 = vadd.f32 %v635, %v636
    %v638 = vrot.slane %v637, 2
    %v639 = vadd.f32 %v637, %v638
    %v640 = vrot.slane %v639, 1
    %v641 = vadd.f32 %v639, %v640
    %s642 = vtos %v641
    %v643 = vstv %s642
    %v644 = vmul.f32 %v555, %v555
    %v645 = vmul.f32 %v560, %v560
    %v646 = vmul.f32 %v565, %v565
    %v647 = vmul.f32 %v570, %v570
    %v648 = vmul.f32 %v575, %v575
    %v649 = vmul.f32 %v580, %v580
    %v650 = vmul.f32 %v585, %v585
    %v651 = vmul.f32 %v590, %v590
    %v652 = vmul.f32 %v595, %v595
    %v653 = vmul.f32 %v600, %v600
    %v654 = vmul.f32 %v605, %v605
    %v655 = vmul.f32 %v610, %v610
    %v656 = vmul.f32 %v615, %v615
    %v657 = vmul.f32 %v620, %v620
    %v658 = vmul.f32 %v625, %v625
    %v659 = vmul.f32 %v630, %v630
    %v660 = vadd.f32 %v644, %v645
    %v661 = vadd.f32 %v660, %v646
    %v662 = vadd.f32 %v661, %v647
    %v663 = vadd.f32 %v662, %v648
    %v664 = vadd.f32 %v663, %v649
    %v665 = vadd.f32 %v664, %v650
    %v666 = vadd.f32 %v665, %v651
    %v667 = vadd.f32 %v666, %v652
    %v668 = vadd.f32 %v667, %v653
    %v669 = vadd.f32 %v668, %v654
    %v670 = vadd.f32 %v669, %v655
    %v671 = vadd.f32 %v670, %v656
    %v672 = vadd.f32 %v671, %v657
    %v673 = vadd.f32 %v672, %v658
    %v674 = vadd.f32 %v673, %v659
    %675 = vadd.xlane.f32.xlu0 %v674
    %v676 = vpop.xlane.xlu0 %675
    %v677 = vrot.slane %v676, 4
    %v678 = vadd.f32 %v676, %v677
    %v679 = vrot.slane %v678, 2
    %v680 = vadd.f32 %v678, %v679
    %v681 = vrot.slane %v680, 1
    %v682 = vadd.f32 %v680, %v681
    %s683 = vtos %v682
    %v684 = vstv %s683
    %v685 = vrsqrt.pop %v684
    %v686 = vmul.f32 %v684, %v685
    %vm687 = vcmp.eq.f32.partialorder %v684, inf
    %v688 = vsel %vm687, %v684, %v686
    %vm689 = vcmp.eq.f32.partialorder %v684, 0.0
    %v690 = vand.u32 %v684, 2147483648
    %v691 = vsel %vm689, %v690, %v688
    %v692 = vmul.f32 %v691, 2.0
    %v693 = vrcp.pop %v692
    %v694 = vmul.f32 %v643, %v693
    %v695 = vmul.f32 %v694, 2.0
    %v696 = vsub.f32 2.0, %v695
    %v697 = vmax.f32 %v696, 0.0
    %v698 = vrsqrt.pop %v697
    %v699 = vmul.f32 %v697, %v698
    %vm700 = vcmp.eq.f32.partialorder %v697, inf
    %v701 = vsel %vm700, %v697, %v699
    %vm702 = vcmp.eq.f32.partialorder %v697, 0.0
    %v703 = vand.u32 %v697, 2147483648
    %v704 = vsel %vm702, %v703, %v701
    %vm705 = vcmask 0
    %706 = vst.msk [vmem:[#allocation8] sm:$0x1] %vm705, %v407
    %vm707 = vcmask 8200
    %708 = vst.msk [vmem:[#allocation8] sm:$0x1] %vm707, %v704
    // Predicated region
    $region34: #{tpu_custom_call.1} parent=1 // pred_check
      _
    $region35: #{tpu_custom_call.1} parent=1 // pred_check_branch
      %710 = sbr.rel (0) target = $region37
    $region36: #{tpu_custom_call.1} parent=1 // pred_region
      %s712 = ssub.s32 128, 128
      %713 = vsyncadd [#allocation4], %s712
      %s715 = sshll.u32 [#allocation7], 4
      %s716 = int_to_ptr.vmem [resolvable:$true] %s715
      %718 = dma.vmem_to_hbm [thread:$0]  %s716, 128, %s6, [#allocation4]
    $region37: #{tpu_custom_call.1} parent=1 // pred_fallthru
      _
    // Predicated region
    $region38: #{tpu_custom_call.1} parent=1 // pred_check
      _
    $region39: #{tpu_custom_call.1} parent=1 // pred_check_branch
      %720 = sbr.rel (0) target = $region41
    $region40: #{tpu_custom_call.1} parent=1 // pred_region
      %s722 = ssub.s32 16, 16
      %723 = vsyncadd [#allocation9], %s722
      %s725 = sshll.u32 [#allocation8], 4
      %s726 = int_to_ptr.vmem [resolvable:$true] %s725
      %728 = dma.vmem_to_hbm [thread:$0]  %s726, 16, %s7, [#allocation9]
    $region41: #{tpu_custom_call.1} parent=1 // pred_fallthru
      _
    // Predicated region
    $region42: #{tpu_custom_call.1} parent=1 // pred_check
      _
    $region43: #{tpu_custom_call.1} parent=1 // pred_check_branch
      %730 = sbr.rel (0) target = $region45
    $region44: #{tpu_custom_call.1} parent=1 // pred_region
      %731 = dma.done [#allocation4], 128
    $region45: #{tpu_custom_call.1} parent=1 // pred_fallthru
      _
    // Predicated region
    $region46: #{tpu_custom_call.1} parent=1 // pred_check
      _
    $region47: #{tpu_custom_call.1} parent=1 // pred_check_branch
      %733 = sbr.rel (0) target = $region49
    $region48: #{tpu_custom_call.1} parent=1 // pred_region
      %734 = dma.done [#allocation9], 16
    $region49: #{tpu_custom_call.1} parent=1 // pred_fallthru
      _
    %735 = vsyncpa [#allocation3], 1
    %736 = vsyncpa [#allocation6], 1
    %737 = vsyncpa [#allocation4], 1
    %738 = vsyncpa [#allocation9], 1

</llo_original>
